<compile_context>
chip_gen: v5e
topology: v5e:2x2
jax: 0.10.0
libtpu: 0.0.40
codegen_flags: <defaults>
</compile_context>

<pallas_src>
import functools

import jax
import jax.numpy as jnp
import numpy as np
from jax.experimental import pallas as pl
from jax.experimental.pallas import tpu as pltpu


def _largest_divisor_leq(n, target):
    """Largest divisor of n that is <= target (at least 1)."""
    t = max(1, min(int(n), int(target)))
    for c in range(t, 0, -1):
        if n % c == 0:
            return c
    return 1


# ----------------- GAP branch + all biases, folded to gbias -----------------
# gbias[b] = (mean_hw(x[b]) @ w1 + b1) @ wb1 + (bb + sum_i b_i @ wb_i)
# One tiny kernel (grid=(1,)): merged spatial sum + the two small matmuls.

def _gap_bias_kernel(x_ref, w1_ref, b1_ref, wb1_ref, cb_ref, o_ref, *, inv_hw):
    xm = jnp.sum(x_ref[...], axis=1) * inv_hw                          # (B, Cin)
    g = jnp.dot(xm, w1_ref[...], preferred_element_type=jnp.float32) + b1_ref[...]
    gb = jnp.dot(g, wb1_ref[...], preferred_element_type=jnp.float32) + cb_ref[...]
    o_ref[...] = gb[:, None, :]                                        # (B, 1, out)


def gap_bias(x3, w1, b1, wb1, cbias):
    B, HW, Cin = x3.shape
    inner = w1.shape[1]
    out = wb1.shape[1]
    kern = functools.partial(_gap_bias_kernel, inv_hw=1.0 / float(HW))
    return pl.pallas_call(
        kern,
        out_shape=jax.ShapeDtypeStruct((B, 1, out), jnp.float32),
        grid=(1,),
        in_specs=[
            pl.BlockSpec((B, HW, Cin), lambda i: (0, 0, 0)),
            pl.BlockSpec((Cin, inner), lambda i: (0, 0)),
            pl.BlockSpec((1, inner), lambda i: (0, 0)),
            pl.BlockSpec((inner, out), lambda i: (0, 0)),
            pl.BlockSpec((1, out), lambda i: (0, 0)),
        ],
        out_specs=pl.BlockSpec((B, 1, out), lambda i: (0, 0, 0)),
    )(x3, w1, b1, wb1, cbias)


# ------------- fused (all branches + concat + bottleneck) matmul ------------

def _fused_kernel(gb_ref, x_ref, w_ref, o_ref):
    # x: (1, TM, K) im2col rows, w: (K, out), gb: (1, 1, out) per-batch bias.
    # One dot + one store per tile (no output read-modify-write).
    o_ref[0] = (jnp.dot(x_ref[0], w_ref[...],
                        preferred_element_type=jnp.float32) + gb_ref[0])


def fused_aspp_matmul(x_pack, w_pack, gbias, rows_target=256):
    B, HW, K = x_pack.shape
    out = w_pack.shape[1]
    TM = _largest_divisor_leq(HW, rows_target)       # 256 rows: fills v6e/v7x MXU
    return pl.pallas_call(
        _fused_kernel,
        out_shape=jax.ShapeDtypeStruct((B, HW, out), jnp.float32),
        grid=(B, HW // TM),
        in_specs=[
            pl.BlockSpec((1, 1, out), lambda b, t: (b, 0, 0)),
            pl.BlockSpec((1, TM, K), lambda b, t: (b, t, 0)),
            pl.BlockSpec((K, out), lambda b, t: (0, 0)),
        ],
        out_specs=pl.BlockSpec((1, TM, out), lambda b, t: (b, t, 0)),
        compiler_params=pltpu.CompilerParams(
            dimension_semantics=("parallel", "parallel")),
    )(gbias, x_pack, w_pack)


# ------------------------------ module glue ---------------------------------

def init_params(key, features, inner=256, out=512, dilations=(12, 24, 36)):
    """Deterministic synthetic parameters; BN (eval) folded into conv weights."""
    keys = jax.random.split(key, 12)
    eps = 1e-5

    def bn_params(k, c):
        k1, k2, k3, k4 = jax.random.split(k, 4)
        gamma = 1.0 + 0.1 * jax.random.normal(k1, (c,), jnp.float32)
        beta = 0.1 * jax.random.normal(k2, (c,), jnp.float32)
        mean = 0.1 * jax.random.normal(k3, (c,), jnp.float32)
        var = jax.random.uniform(k4, (c,), jnp.float32, minval=0.5, maxval=1.5)
        return gamma, beta, mean, var

    def fold(w, bnp):
        gamma, beta, mean, var = bnp
        s = gamma / jnp.sqrt(var + eps)           # per-output-channel scale
        return w * s, (beta - mean * s).reshape(1, -1)

    p = {}
    w1 = 0.1 * jax.random.normal(keys[0], (features, inner), jnp.float32)
    p['w1'], p['b1'] = fold(w1, bn_params(keys[1], inner))
    w2 = 0.1 * jax.random.normal(keys[2], (features, inner), jnp.float32)
    p['w2'], p['b2'] = fold(w2, bn_params(keys[3], inner))
    for i, d in enumerate(dilations):
        kw = jax.random.split(keys[4 + i], 2)
        w = 0.1 * jax.random.normal(kw[0], (9, features, inner), jnp.float32)
        wf, bf = fold(w, bn_params(kw[1], inner))
        p[f'w{3 + i}'], p[f'b{3 + i}'], p[f'd{3 + i}'] = wf, bf, d
    wb = 0.05 * jax.random.normal(keys[10], (5 * inner, out), jnp.float32)
    p['wb'], p['bb'] = fold(wb, bn_params(keys[11], out))
    return p


def aspp_forward(x_nchw, params):
    """ASPPModule.forward (eval). Input/output NCHW; kernels run channels-last."""
    hp = jax.lax.Precision.HIGHEST
    x = jnp.transpose(x_nchw, (0, 2, 3, 1)).astype(jnp.float32)   # NHWC
    B, H, W, C = x.shape
    HW = H * W
    inner = params['w2'].shape[1]
    out_f = params['wb'].shape[1]
    x3 = x.reshape(B, HW, C)

    wb = params['wb']
    wb1, wb2, wb3, wb4, wb5 = (wb[i * inner:(i + 1) * inner] for i in range(5))

    # --- trace-time weight/bias folding through the bottleneck 1x1 conv -----
    # constant bias: bottleneck bias + every branch bias pushed through wb_i.
    cbias = (params['bb']
             + jnp.matmul(params['b2'], wb2, precision=hp)
             + jnp.matmul(params['b3'], wb3, precision=hp)
             + jnp.matmul(params['b4'], wb4, precision=hp)
             + jnp.matmul(params['b5'], wb5, precision=hp))           # (1, out)

    # per-tap effective weights, keyed by spatial shift; taps sampling only
    # zero padding (d >= H or d >= W) are dropped; equal shifts are merged
    # (the 1x1 branch and every dilated branch's centre tap share shift (0,0)).
    tap_w = {}

    def add_tap(shift, w_eff):
        tap_w[shift] = tap_w.get(shift, 0.0) + w_eff

    add_tap((0, 0), jnp.matmul(params['w2'], wb2, precision=hp))
    for name, wb_i in (('3', wb3), ('4', wb4), ('5', wb5)):
        d = params[f'd{name}']                       # python int
        w9 = params[f'w{name}']                      # (9, Cin, inner)
        for ky in range(3):
            for kx in range(3):
                if (ky != 1 and d >= H) or (kx != 1 and d >= W):
                    continue                         # window entirely in padding
                add_tap(((ky - 1) * d, (kx - 1) * d),
                        jnp.matmul(w9[ky * 3 + kx], wb_i, precision=hp))

    shifts = sorted(tap_w.keys(), key=lambda s: (s != (0, 0), s))  # centre first
    pad = max(max(abs(dy), abs(dx)) for dy, dx in shifts)
    xp = jnp.pad(x, ((0, 0), (pad, pad), (pad, pad), (0, 0))) if pad > 0 else x

    # lane-dense im2col packing (in the wrapper, not in-kernel) + weight stack.
    parts, w_parts = [], []
    for dy, dx in shifts:
        parts.append(xp[:, pad + dy:pad + dy + H, pad + dx:pad + dx + W, :])
        w_parts.append(tap_w[(dy, dx)])
    x_pack = jnp.concatenate(parts, axis=-1).reshape(B, HW, len(shifts) * C)
    w_pack = jnp.concatenate(w_parts, axis=0)        # (ntaps*Cin, out)

    # GAP branch + all biases -> per-batch (1, out) bias, in one tiny kernel.
    gbias = gap_bias(x3, params['w1'], params['b1'], wb1, cbias)

    # fused branches + concat + bottleneck: one matmul kernel.
    bottle = fused_aspp_matmul(x_pack, w_pack, gbias)
    # TODO(synk): Dropout2d(0.1) is stochastic only in training; eval mode is identity.
    return jnp.transpose(bottle.reshape(B, H, W, out_f), (0, 3, 1, 2))   # NCHW


# ---------------------------- pure-JAX reference ----------------------------

def aspp_reference(x_nchw, params):
    x = jnp.transpose(x_nchw, (0, 2, 3, 1)).astype(jnp.float32)
    B, H, W, C = x.shape
    hp = jax.lax.Precision.HIGHEST

    g = jnp.mean(x, axis=(1, 2))
    g = jnp.dot(g, params['w1'], precision=hp) + params['b1']
    feat1 = jnp.broadcast_to(g[:, None, None, :], (B, H, W, params['w1'].shape[1]))

    feat2 = jnp.einsum('bhwc,co->bhwo', x, params['w2'], precision=hp) + params['b2']

    def dil(wkey, bkey, dkey):
        d = params[dkey]
        w = params[wkey].reshape(3, 3, C, -1)
        y = jax.lax.conv_general_dilated(
            x, w, window_strides=(1, 1), padding=[(d, d), (d, d)],
            rhs_dilation=(d, d),
            dimension_numbers=('NHWC', 'HWIO', 'NHWC'), precision=hp)
        return y + params[bkey]

    feat3 = dil('w3', 'b3', 'd3')
    feat4 = dil('w4', 'b4', 'd4')
    feat5 = dil('w5', 'b5', 'd5')

    cat = jnp.concatenate([feat1, feat2, feat3, feat4, feat5], axis=-1)
    out = jnp.einsum('bhwc,co->bhwo', cat, params['wb'], precision=hp) + params['bb']
    return jnp.transpose(out, (0, 3, 1, 2))


# --------------------------------- main -------------------------------------

if __name__ == "__main__":
    key = jax.random.PRNGKey(0)
    kx, kp = jax.random.split(key)

    B, features, H, W = 2, 8, 16, 16
    inner_features, out_features = 256, 512
    dilations = (12, 24, 36)

    x = jax.random.normal(kx, (B, features, H, W), jnp.float32)
    params = init_params(kp, features, inner_features, out_features, dilations)

    y = jax.block_until_ready(aspp_forward(x, params))
    assert y.shape == (B, out_features, H, W), y.shape

    y_ref = jax.block_until_ready(aspp_reference(x, params))
    np.testing.assert_allclose(np.asarray(y), np.asarray(y_ref),
                               rtol=5e-2, atol=5e-2)
    print("KERNEL_OK")
</pallas_src>

<mosaic_0001>
module attributes {stable_mosaic.version = 11 : i64} {
  func.func @_gap_bias_kernel(%arg0: i32, %arg1: memref<2x256x8xf32, #tpu.memory_space<vmem>>, %arg2: memref<8x256xf32, #tpu.memory_space<vmem>>, %arg3: memref<1x256xf32, #tpu.memory_space<vmem>>, %arg4: memref<256x512xf32, #tpu.memory_space<vmem>>, %arg5: memref<1x512xf32, #tpu.memory_space<vmem>>, %arg6: memref<2x1x512xf32, #tpu.memory_space<vmem>>) attributes {dimension_semantics = [#tpu.dimension_semantics<arbitrary>], iteration_bounds = array<i64: 1>, scalar_prefetch = 0 : i64, scratch_operands = 0 : i64, tpu.core_type = #tpu.core_type<tc>, window_params = [{pipeline_mode = #tpu.pipeline_mode<synchronous>, transform_indices = @transform_0, window_bounds = array<i64: 2, 256, 8>}, {pipeline_mode = #tpu.pipeline_mode<synchronous>, transform_indices = @transform_1, window_bounds = array<i64: 8, 256>}, {pipeline_mode = #tpu.pipeline_mode<synchronous>, transform_indices = @transform_2, window_bounds = array<i64: 1, 256>}, {pipeline_mode = #tpu.pipeline_mode<synchronous>, transform_indices = @transform_3, window_bounds = array<i64: 256, 512>}, {pipeline_mode = #tpu.pipeline_mode<synchronous>, transform_indices = @transform_4, window_bounds = array<i64: 1, 512>}, {pipeline_mode = #tpu.pipeline_mode<synchronous>, transform_indices = @transform_5, window_bounds = array<i64: 2, 1, 512>}]} {
    %c0 = arith.constant 0 : index
    %c0_0 = arith.constant 0 : index
    %c0_1 = arith.constant 0 : index
    %0 = vector.load %arg1[%c0, %c0_0, %c0_1] : memref<2x256x8xf32, #tpu.memory_space<vmem>>, vector<2x256x8xf32>
    %cst = arith.constant dense<0.000000e+00> : vector<2x8xf32>
    %1 = vector.multi_reduction <add>, %0, %cst [1] : vector<2x256x8xf32> to vector<2x8xf32>
    %cst_2 = arith.constant 3.906250e-03 : f32
    %2 = vector.broadcast %cst_2 : f32 to vector<2x8xf32>
    %3 = arith.mulf %1, %2 : vector<2x8xf32>
    %c0_3 = arith.constant 0 : index
    %c0_4 = arith.constant 0 : index
    %4 = vector.load %arg2[%c0_3, %c0_4] : memref<8x256xf32, #tpu.memory_space<vmem>>, vector<8x256xf32>
    %cst_5 = arith.constant dense<0.000000e+00> : vector<2x256xf32>
    %5 = tpu.matmul %3, %4, %cst_5 {dimension_numbers = #tpu.dot_dimension_numbers<[1], [0], [0], [1], [0, 0, 1, 1], [], []>} : vector<2x8xf32>, vector<8x256xf32>, vector<2x256xf32> -> vector<2x256xf32>
    %c0_6 = arith.constant 0 : index
    %c0_7 = arith.constant 0 : index
    %6 = vector.load %arg3[%c0_6, %c0_7] : memref<1x256xf32, #tpu.memory_space<vmem>>, vector<1x256xf32>
    %7 = vector.broadcast %6 : vector<1x256xf32> to vector<2x256xf32>
    %8 = arith.addf %5, %7 : vector<2x256xf32>
    %c0_8 = arith.constant 0 : index
    %c0_9 = arith.constant 0 : index
    %9 = vector.load %arg4[%c0_8, %c0_9] : memref<256x512xf32, #tpu.memory_space<vmem>>, vector<256x512xf32>
    %cst_10 = arith.constant dense<0.000000e+00> : vector<2x512xf32>
    %10 = tpu.matmul %8, %9, %cst_10 {dimension_numbers = #tpu.dot_dimension_numbers<[1], [0], [0], [1], [0, 0, 1, 1], [], []>} : vector<2x256xf32>, vector<256x512xf32>, vector<2x512xf32> -> vector<2x512xf32>
    %c0_11 = arith.constant 0 : index
    %c0_12 = arith.constant 0 : index
    %11 = vector.load %arg5[%c0_11, %c0_12] : memref<1x512xf32, #tpu.memory_space<vmem>>, vector<1x512xf32>
    %12 = vector.broadcast %11 : vector<1x512xf32> to vector<2x512xf32>
    %13 = arith.addf %10, %12 : vector<2x512xf32>
    %14 = vector.shape_cast %13 : vector<2x512xf32> to vector<2x1x512xf32>
    %c0_13 = arith.constant 0 : index
    %c0_14 = arith.constant 0 : index
    %c0_15 = arith.constant 0 : index
    %15 = vector.load %arg6[%c0_13, %c0_14, %c0_15] : memref<2x1x512xf32, #tpu.memory_space<vmem>>, vector<2x1x512xf32>
    tpu.vector_store %arg6[%c0_13, %c0_14, %c0_15], %14 {strides = array<i32>} : memref<2x1x512xf32, #tpu.memory_space<vmem>>, vector<2x1x512xf32>,
    return
  }
  func.func @transform_0(%arg0: i32) -> (i32, i32, i32) {
    %c0_i32 = arith.constant 0 : i32
    %c0_i32_0 = arith.constant 0 : i32
    %c0_i32_1 = arith.constant 0 : i32
    %c0_i32_2 = arith.constant 0 : i32
    return %c0_i32, %c0_i32_0, %c0_i32_1 : i32, i32, i32
  }
  func.func @transform_1(%arg0: i32) -> (i32, i32) {
    %c0_i32 = arith.constant 0 : i32
    %c0_i32_0 = arith.constant 0 : i32
    %c0_i32_1 = arith.constant 0 : i32
    return %c0_i32, %c0_i32_0 : i32, i32
  }
  func.func @transform_2(%arg0: i32) -> (i32, i32) {
    %c0_i32 = arith.constant 0 : i32
    %c0_i32_0 = arith.constant 0 : i32
    %c0_i32_1 = arith.constant 0 : i32
    return %c0_i32, %c0_i32_0 : i32, i32
  }
  func.func @transform_3(%arg0: i32) -> (i32, i32) {
    %c0_i32 = arith.constant 0 : i32
    %c0_i32_0 = arith.constant 0 : i32
    %c0_i32_1 = arith.constant 0 : i32
    return %c0_i32, %c0_i32_0 : i32, i32
  }
  func.func @transform_4(%arg0: i32) -> (i32, i32) {
    %c0_i32 = arith.constant 0 : i32
    %c0_i32_0 = arith.constant 0 : i32
    %c0_i32_1 = arith.constant 0 : i32
    return %c0_i32, %c0_i32_0 : i32, i32
  }
  func.func @transform_5(%arg0: i32) -> (i32, i32, i32) {
    %c0_i32 = arith.constant 0 : i32
    %c0_i32_0 = arith.constant 0 : i32
    %c0_i32_1 = arith.constant 0 : i32
    %c0_i32_2 = arith.constant 0 : i32
    return %c0_i32, %c0_i32_0, %c0_i32_1 : i32, i32, i32
  }
}

</mosaic_0001>

<llo_original>
// kernel: tpu_custom_call.1
$region0: #{tpu_custom_call.1}
  #allocation0 [shape = 'u32[]', space=smem, size = 0x4, offset = 0x4, fixed_abs, tag = 'smem constant byte address 0x4 - core index']
  #allocation1 [shape = 'u32[72,128]{1,0:T(1,128)}', space=vmem, size = 0x9000, scoped, tag = 'internal scratch']
  %s0 = inlined_call_operand.vmem [shape: f32[2,256,8], index: 0, kind: input, shape index: {}]
  %s1 = inlined_call_operand.vmem [shape: f32[8,256], index: 1, kind: input, shape index: {}]
  %s2 = inlined_call_operand.vmem [shape: f32[1,256], index: 2, kind: input, shape index: {}]
  %s3 = inlined_call_operand.hbm [shape: f32[256,512], index: 3, kind: input, shape index: {}]
  %s4 = inlined_call_operand.vmem [shape: f32[1,512], index: 4, kind: input, shape index: {}]
  %s5 = inlined_call_operand.hbm [shape: f32[2,1,512], index: 5, kind: output, shape index: {}]
  %s6 = sld [smem:[#allocation0]]
  $region34: #{tpu_custom_call.1} parent=0
    _
  %s8 = ssub.s32 1, %s6
  %s9 = scalar_select 0, %s8, %s6
  $region1: #{tpu_custom_call.1} parent=0
    #allocation2 [shape = 'u8[524288]{0}', space=vmem, size = 0x80000, scoped, tag = 'input window, operand 3, single buffered']
    #allocation3 [shape = 's32[1]{0}', space=sflag, size = 0x4, scoped, tag = 'scoped memory for tpu_custom_call.1']
    #allocation4 [shape = 's32[1]{0}', space=sflag, size = 0x4, scoped, tag = 'scoped memory for tpu_custom_call.1']
    #allocation5 [shape = 'u8[4096]{0}', space=vmem, size = 0x1000, scoped, tag = 'output window, operand 0, single buffered']
    %10 = vsyncpa [#allocation3], 0
    %11 = vsyncpa [#allocation4], 0
    // Predicated region
    $region2: #{tpu_custom_call.1} parent=1 // pred_check
      _
    $region3: #{tpu_custom_call.1} parent=1 // pred_check_branch
      %13 = sbr.rel (0) target = $region5
    $region4: #{tpu_custom_call.1} parent=1 // pred_region
      _
    $region5: #{tpu_custom_call.1} parent=1 // pred_fallthru
      _
    // Predicated region
    $region6: #{tpu_custom_call.1} parent=1 // pred_check
      _
    $region7: #{tpu_custom_call.1} parent=1 // pred_check_branch
      %15 = sbr.rel (0) target = $region9
    $region8: #{tpu_custom_call.1} parent=1 // pred_region
      _
    $region9: #{tpu_custom_call.1} parent=1 // pred_fallthru
      _
    // Predicated region
    $region10: #{tpu_custom_call.1} parent=1 // pred_check
      _
    $region11: #{tpu_custom_call.1} parent=1 // pred_check_branch
      %17 = sbr.rel (0) target = $region13
    $region12: #{tpu_custom_call.1} parent=1 // pred_region
      _
    $region13: #{tpu_custom_call.1} parent=1 // pred_fallthru
      _
    // Predicated region
    $region14: #{tpu_custom_call.1} parent=1 // pred_check
      _
    $region15: #{tpu_custom_call.1} parent=1 // pred_check_branch
      %19 = sbr.rel (0) target = $region17
    $region16: #{tpu_custom_call.1} parent=1 // pred_region
      %21 = vsyncadd [#allocation3], 0
      %s22 = sshll.u32 %s3, 4
      %s23 = int_to_ptr.hbm [resolvable:$true] %s22
      %s24 = sshll.u32 [#allocation2], 4
      %s25 = int_to_ptr.vmem [resolvable:$true] %s24
      %30 = dma.hbm_to_vmem [thread:$0]  %s23, 16384, %s25, [#allocation3], 512, 512, 32
    $region17: #{tpu_custom_call.1} parent=1 // pred_fallthru
      _
    // Predicated region
    $region18: #{tpu_custom_call.1} parent=1 // pred_check
      _
    $region19: #{tpu_custom_call.1} parent=1 // pred_check_branch
      %32 = sbr.rel (0) target = $region21
    $region20: #{tpu_custom_call.1} parent=1 // pred_region
      _
    $region21: #{tpu_custom_call.1} parent=1 // pred_fallthru
      _
    // Predicated region
    $region22: #{tpu_custom_call.1} parent=1 // pred_check
      _
    $region23: #{tpu_custom_call.1} parent=1 // pred_check_branch
      %34 = sbr.rel (0) target = $region25
    $region24: #{tpu_custom_call.1} parent=1 // pred_region
      %36 = dma.done [#allocation3], 16384
    $region25: #{tpu_custom_call.1} parent=1 // pred_fallthru
      _
    %v37 = vld [vmem:[%s0] sm:$0xff]
    %v38 = vld [vmem:[%s0 + $0x8] sm:$0xff]
    %v39 = vld [vmem:[%s0 + $0x10] sm:$0xff]
    %v40 = vld [vmem:[%s0 + $0x18] sm:$0xff]
    %v41 = vld [vmem:[%s0 + $0x20] sm:$0xff]
    %v42 = vld [vmem:[%s0 + $0x28] sm:$0xff]
    %v43 = vld [vmem:[%s0 + $0x30] sm:$0xff]
    %v44 = vld [vmem:[%s0 + $0x38] sm:$0xff]
    %v45 = vld [vmem:[%s0 + $0x40] sm:$0xff]
    %v46 = vld [vmem:[%s0 + $0x48] sm:$0xff]
    %v47 = vld [vmem:[%s0 + $0x50] sm:$0xff]
    %v48 = vld [vmem:[%s0 + $0x58] sm:$0xff]
    %v49 = vld [vmem:[%s0 + $0x60] sm:$0xff]
    %v50 = vld [vmem:[%s0 + $0x68] sm:$0xff]
    %v51 = vld [vmem:[%s0 + $0x70] sm:$0xff]
    %v52 = vld [vmem:[%s0 + $0x78] sm:$0xff]
    %v53 = vld [vmem:[%s0 + $0x80] sm:$0xff]
    %v54 = vld [vmem:[%s0 + $0x88] sm:$0xff]
    %v55 = vld [vmem:[%s0 + $0x90] sm:$0xff]
    %v56 = vld [vmem:[%s0 + $0x98] sm:$0xff]
    %v57 = vld [vmem:[%s0 + $0xa0] sm:$0xff]
    %v58 = vld [vmem:[%s0 + $0xa8] sm:$0xff]
    %v59 = vld [vmem:[%s0 + $0xb0] sm:$0xff]
    %v60 = vld [vmem:[%s0 + $0xb8] sm:$0xff]
    %v61 = vld [vmem:[%s0 + $0xc0] sm:$0xff]
    %v62 = vld [vmem:[%s0 + $0xc8] sm:$0xff]
    %v63 = vld [vmem:[%s0 + $0xd0] sm:$0xff]
    %v64 = vld [vmem:[%s0 + $0xd8] sm:$0xff]
    %v65 = vld [vmem:[%s0 + $0xe0] sm:$0xff]
    %v66 = vld [vmem:[%s0 + $0xe8] sm:$0xff]
    %v67 = vld [vmem:[%s0 + $0xf0] sm:$0xff]
    %v68 = vld [vmem:[%s0 + $0xf8] sm:$0xff]
    %v69 = vld [vmem:[%s0 + $0x100] sm:$0xff]
    %v70 = vld [vmem:[%s0 + $0x108] sm:$0xff]
    %v71 = vld [vmem:[%s0 + $0x110] sm:$0xff]
    %v72 = vld [vmem:[%s0 + $0x118] sm:$0xff]
    %v73 = vld [vmem:[%s0 + $0x120] sm:$0xff]
    %v74 = vld [vmem:[%s0 + $0x128] sm:$0xff]
    %v75 = vld [vmem:[%s0 + $0x130] sm:$0xff]
    %v76 = vld [vmem:[%s0 + $0x138] sm:$0xff]
    %v77 = vld [vmem:[%s0 + $0x140] sm:$0xff]
    %v78 = vld [vmem:[%s0 + $0x148] sm:$0xff]
    %v79 = vld [vmem:[%s0 + $0x150] sm:$0xff]
    %v80 = vld [vmem:[%s0 + $0x158] sm:$0xff]
    %v81 = vld [vmem:[%s0 + $0x160] sm:$0xff]
    %v82 = vld [vmem:[%s0 + $0x168] sm:$0xff]
    %v83 = vld [vmem:[%s0 + $0x170] sm:$0xff]
    %v84 = vld [vmem:[%s0 + $0x178] sm:$0xff]
    %v85 = vld [vmem:[%s0 + $0x180] sm:$0xff]
    %v86 = vld [vmem:[%s0 + $0x188] sm:$0xff]
    %v87 = vld [vmem:[%s0 + $0x190] sm:$0xff]
    %v88 = vld [vmem:[%s0 + $0x198] sm:$0xff]
    %v89 = vld [vmem:[%s0 + $0x1a0] sm:$0xff]
    %v90 = vld [vmem:[%s0 + $0x1a8] sm:$0xff]
    %v91 = vld [vmem:[%s0 + $0x1b0] sm:$0xff]
    %v92 = vld [vmem:[%s0 + $0x1b8] sm:$0xff]
    %v93 = vld [vmem:[%s0 + $0x1c0] sm:$0xff]
    %v94 = vld [vmem:[%s0 + $0x1c8] sm:$0xff]
    %v95 = vld [vmem:[%s0 + $0x1d0] sm:$0xff]
    %v96 = vld [vmem:[%s0 + $0x1d8] sm:$0xff]
    %v97 = vld [vmem:[%s0 + $0x1e0] sm:$0xff]
    %v98 = vld [vmem:[%s0 + $0x1e8] sm:$0xff]
    %v99 = vld [vmem:[%s0 + $0x1f0] sm:$0xff]
    %v100 = vld [vmem:[%s0 + $0x1f8] sm:$0xff]
    %vm101 = vcmask 64512
    %v102 = vsel %vm101, %v37, 0.0
    %v103 = vsel %vm101, %v38, 0.0
    %v104 = vadd.f32 %v102, %v103
    %v105 = vsel %vm101, %v39, 0.0
    %v106 = vadd.f32 %v104, %v105
    %v107 = vsel %vm101, %v40, 0.0
    %v108 = vadd.f32 %v106, %v107
    %v109 = vsel %vm101, %v41, 0.0
    %v110 = vadd.f32 %v108, %v109
    %v111 = vsel %vm101, %v42, 0.0
    %v112 = vadd.f32 %v110, %v111
    %v113 = vsel %vm101, %v43, 0.0
    %v114 = vadd.f32 %v112, %v113
    %v115 = vsel %vm101, %v44, 0.0
    %v116 = vadd.f32 %v114, %v115
    %v117 = vsel %vm101, %v45, 0.0
    %v118 = vadd.f32 %v116, %v117
    %v119 = vsel %vm101, %v46, 0.0
    %v120 = vadd.f32 %v118, %v119
    %v121 = vsel %vm101, %v47, 0.0
    %v122 = vadd.f32 %v120, %v121
    %v123 = vsel %vm101, %v48, 0.0
    %v124 = vadd.f32 %v122, %v123
    %v125 = vsel %vm101, %v49, 0.0
    %v126 = vadd.f32 %v124, %v125
    %v127 = vsel %vm101, %v50, 0.0
    %v128 = vadd.f32 %v126, %v127
    %v129 = vsel %vm101, %v51, 0.0
    %v130 = vadd.f32 %v128, %v129
    %v131 = vsel %vm101, %v52, 0.0
    %v132 = vadd.f32 %v130, %v131
    %v133 = vsel %vm101, %v53, 0.0
    %v134 = vadd.f32 %v132, %v133
    %v135 = vsel %vm101, %v54, 0.0
    %v136 = vadd.f32 %v134, %v135
    %v137 = vsel %vm101, %v55, 0.0
    %v138 = vadd.f32 %v136, %v137
    %v139 = vsel %vm101, %v56, 0.0
    %v140 = vadd.f32 %v138, %v139
    %v141 = vsel %vm101, %v57, 0.0
    %v142 = vadd.f32 %v140, %v141
    %v143 = vsel %vm101, %v58, 0.0
    %v144 = vadd.f32 %v142, %v143
    %v145 = vsel %vm101, %v59, 0.0
    %v146 = vadd.f32 %v144, %v145
    %v147 = vsel %vm101, %v60, 0.0
    %v148 = vadd.f32 %v146, %v147
    %v149 = vsel %vm101, %v61, 0.0
    %v150 = vadd.f32 %v148, %v149
    %v151 = vsel %vm101, %v62, 0.0
    %v152 = vadd.f32 %v150, %v151
    %v153 = vsel %vm101, %v63, 0.0
    %v154 = vadd.f32 %v152, %v153
    %v155 = vsel %vm101, %v64, 0.0
    %v156 = vadd.f32 %v154, %v155
    %v157 = vsel %vm101, %v65, 0.0
    %v158 = vadd.f32 %v156, %v157
    %v159 = vsel %vm101, %v66, 0.0
    %v160 = vadd.f32 %v158, %v159
    %v161 = vsel %vm101, %v67, 0.0
    %v162 = vadd.f32 %v160, %v161
    %v163 = vsel %vm101, %v68, 0.0
    %v164 = vadd.f32 %v162, %v163
    %v165 = vrot.slane %v164, 4
    %v166 = vadd.f32 %v164, %v165
    %v167 = vrot.slane %v166, 2
    %v168 = vadd.f32 %v166, %v167
    %v169 = vrot.slane %v168, 1
    %v170 = vadd.f32 %v168, %v169
    %v171 = vsel %vm101, %v69, 0.0
    %v172 = vsel %vm101, %v70, 0.0
    %v173 = vadd.f32 %v171, %v172
    %v174 = vsel %vm101, %v71, 0.0
    %v175 = vadd.f32 %v173, %v174
    %v176 = vsel %vm101, %v72, 0.0
    %v177 = vadd.f32 %v175, %v176
    %v178 = vsel %vm101, %v73, 0.0
    %v179 = vadd.f32 %v177, %v178
    %v180 = vsel %vm101, %v74, 0.0
    %v181 = vadd.f32 %v179, %v180
    %v182 = vsel %vm101, %v75, 0.0
    %v183 = vadd.f32 %v181, %v182
    %v184 = vsel %vm101, %v76, 0.0
    %v185 = vadd.f32 %v183, %v184
    %v186 = vsel %vm101, %v77, 0.0
    %v187 = vadd.f32 %v185, %v186
    %v188 = vsel %vm101, %v78, 0.0
    %v189 = vadd.f32 %v187, %v188
    %v190 = vsel %vm101, %v79, 0.0
    %v191 = vadd.f32 %v189, %v190
    %v192 = vsel %vm101, %v80, 0.0
    %v193 = vadd.f32 %v191, %v192
    %v194 = vsel %vm101, %v81, 0.0
    %v195 = vadd.f32 %v193, %v194
    %v196 = vsel %vm101, %v82, 0.0
    %v197 = vadd.f32 %v195, %v196
    %v198 = vsel %vm101, %v83, 0.0
    %v199 = vadd.f32 %v197, %v198
    %v200 = vsel %vm101, %v84, 0.0
    %v201 = vadd.f32 %v199, %v200
    %v202 = vsel %vm101, %v85, 0.0
    %v203 = vadd.f32 %v201, %v202
    %v204 = vsel %vm101, %v86, 0.0
    %v205 = vadd.f32 %v203, %v204
    %v206 = vsel %vm101, %v87, 0.0
    %v207 = vadd.f32 %v205, %v206
    %v208 = vsel %vm101, %v88, 0.0
    %v209 = vadd.f32 %v207, %v208
    %v210 = vsel %vm101, %v89, 0.0
    %v211 = vadd.f32 %v209, %v210
    %v212 = vsel %vm101, %v90, 0.0
    %v213 = vadd.f32 %v211, %v212
    %v214 = vsel %vm101, %v91, 0.0
    %v215 = vadd.f32 %v213, %v214
    %v216 = vsel %vm101, %v92, 0.0
    %v217 = vadd.f32 %v215, %v216
    %v218 = vsel %vm101, %v93, 0.0
    %v219 = vadd.f32 %v217, %v218
    %v220 = vsel %vm101, %v94, 0.0
    %v221 = vadd.f32 %v219, %v220
    %v222 = vsel %vm101, %v95, 0.0
    %v223 = vadd.f32 %v221, %v222
    %v224 = vsel %vm101, %v96, 0.0
    %v225 = vadd.f32 %v223, %v224
    %v226 = vsel %vm101, %v97, 0.0
    %v227 = vadd.f32 %v225, %v226
    %v228 = vsel %vm101, %v98, 0.0
    %v229 = vadd.f32 %v227, %v228
    %v230 = vsel %vm101, %v99, 0.0
    %v231 = vadd.f32 %v229, %v230
    %v232 = vsel %vm101, %v100, 0.0
    %v233 = vadd.f32 %v231, %v232
    %v234 = vrot.slane %v233, 4
    %v235 = vadd.f32 %v233, %v234
    %v236 = vrot.slane %v235, 2
    %v237 = vadd.f32 %v235, %v236
    %v238 = vrot.slane %v237, 1
    %v239 = vadd.f32 %v237, %v238
    %v240 = vmul.f32 %v170, 0.00390625
    %v241 = vmul.f32 %v239, 0.00390625
    %v242 = vld [vmem:[%s1] sm:$0xff]
    %v243 = vld [vmem:[%s1 + $0x8] sm:$0xff]
    %v244 = vld [vmem:[%s2] sm:$0x3]
    %v246 = vperm.slane %v244, 0
    %v247 = vperm.slane %v244, 1
    %vm252 = vcmask 1041409
    %v253 = vsel %vm252, %v241, %v240
    %v254 = vsel %vm101, %v253, 0
    %256 = vmatpush.msra.mxu0 0.0
    %257 = vmatpush.msra.mxu0 0.0
    %258 = vmatpush.msra.mxu0 0.0
    %259 = vmatpush.msra.mxu0 0.0
    %260 = vmatpush.msra.mxu0 0.0
    %261 = vmatpush.msra.mxu0 0.0
    %262 = vmatpush.msra.mxu0 0.0
    %263 = vmatpush.msra.mxu0 0.0
    %264 = vmatpush.msra.mxu0 0.0
    %265 = vmatpush.msra.mxu0 0.0
    %266 = vmatpush.msra.mxu0 0.0
    %267 = vmatpush.msra.mxu0 0.0
    %268 = vmatpush.msra.mxu0 0.0
    %269 = vmatpush.msra.mxu0 0.0
    %270 = vmatpush.msra.mxu0 0.0
    %271 = vmatpush.msra.mxu0 %v242
    %272 = vmatmul.f32.gmra.mxu0 %v254
    %v273 = vpop.f32.mrf.mxu0
    %v274 = vadd.f32 %v246, %v273
    %275 = vdwg.mxu0
    %276 = vmatpush.msra.mxu0 0.0
    %277 = vmatpush.msra.mxu0 0.0
    %278 = vmatpush.msra.mxu0 0.0
    %279 = vmatpush.msra.mxu0 0.0
    %280 = vmatpush.msra.mxu0 0.0
    %281 = vmatpush.msra.mxu0 0.0
    %282 = vmatpush.msra.mxu0 0.0
    %283 = vmatpush.msra.mxu0 0.0
    %284 = vmatpush.msra.mxu0 0.0
    %285 = vmatpush.msra.mxu0 0.0
    %286 = vmatpush.msra.mxu0 0.0
    %287 = vmatpush.msra.mxu0 0.0
    %288 = vmatpush.msra.mxu0 0.0
    %289 = vmatpush.msra.mxu0 0.0
    %290 = vmatpush.msra.mxu0 0.0
    %291 = vmatpush.msra.mxu0 %v243
    %292 = vmatmul.f32.gmra.mxu0 %v254
    %v293 = vpop.f32.mrf.mxu0
    %v294 = vadd.f32 %v247, %v293
    %295 = vdwg.mxu0
    %v296 = vld [vmem:[#allocation2] sm:$0xff]
    %v297 = vld [vmem:[#allocation2 + $0x8] sm:$0xff]
    %v298 = vld [vmem:[#allocation2 + $0x10] sm:$0xff]
    %v299 = vld [vmem:[#allocation2 + $0x18] sm:$0xff]
    %v300 = vld [vmem:[#allocation2 + $0x20] sm:$0xff]
    %v301 = vld [vmem:[#allocation2 + $0x28] sm:$0xff]
    %v302 = vld [vmem:[#allocation2 + $0x30] sm:$0xff]
    %v303 = vld [vmem:[#allocation2 + $0x38] sm:$0xff]
    %v304 = vld [vmem:[#allocation2 + $0x40] sm:$0xff]
    %v305 = vld [vmem:[#allocation2 + $0x48] sm:$0xff]
    %v306 = vld [vmem:[#allocation2 + $0x50] sm:$0xff]
    %v307 = vld [vmem:[#allocation2 + $0x58] sm:$0xff]
    %v308 = vld [vmem:[#allocation2 + $0x60] sm:$0xff]
    %v309 = vld [vmem:[#allocation2 + $0x68] sm:$0xff]
    %v310 = vld [vmem:[#allocation2 + $0x70] sm:$0xff]
    %v311 = vld [vmem:[#allocation2 + $0x78] sm:$0xff]
    %v312 = vld [vmem:[#allocation2 + $0x80] sm:$0xff]
    %v313 = vld [vmem:[#allocation2 + $0x88] sm:$0xff]
    %v314 = vld [vmem:[#allocation2 + $0x90] sm:$0xff]
    %v315 = vld [vmem:[#allocation2 + $0x98] sm:$0xff]
    %v316 = vld [vmem:[#allocation2 + $0xa0] sm:$0xff]
    %v317 = vld [vmem:[#allocation2 + $0xa8] sm:$0xff]
    %v318 = vld [vmem:[#allocation2 + $0xb0] sm:$0xff]
    %v319 = vld [vmem:[#allocation2 + $0xb8] sm:$0xff]
    %v320 = vld [vmem:[#allocation2 + $0xc0] sm:$0xff]
    %v321 = vld [vmem:[#allocation2 + $0xc8] sm:$0xff]
    %v322 = vld [vmem:[#allocation2 + $0xd0] sm:$0xff]
    %v323 = vld [vmem:[#allocation2 + $0xd8] sm:$0xff]
    %v324 = vld [vmem:[#allocation2 + $0xe0] sm:$0xff]
    %v325 = vld [vmem:[#allocation2 + $0xe8] sm:$0xff]
    %v326 = vld [vmem:[#allocation2 + $0xf0] sm:$0xff]
    %v327 = vld [vmem:[#allocation2 + $0xf8] sm:$0xff]
    %v328 = vld [vmem:[#allocation2 + $0x100] sm:$0xff]
    %v329 = vld [vmem:[#allocation2 + $0x108] sm:$0xff]
    %v330 = vld [vmem:[#allocation2 + $0x110] sm:$0xff]
    %v331 = vld [vmem:[#allocation2 + $0x118] sm:$0xff]
    %v332 = vld [vmem:[#allocation2 + $0x120] sm:$0xff]
    %v333 = vld [vmem:[#allocation2 + $0x128] sm:$0xff]
    %v334 = vld [vmem:[#allocation2 + $0x130] sm:$0xff]
    %v335 = vld [vmem:[#allocation2 + $0x138] sm:$0xff]
    %v336 = vld [vmem:[#allocation2 + $0x140] sm:$0xff]
    %v337 = vld [vmem:[#allocation2 + $0x148] sm:$0xff]
    %v338 = vld [vmem:[#allocation2 + $0x150] sm:$0xff]
    %v339 = vld [vmem:[#allocation2 + $0x158] sm:$0xff]
    %v340 = vld [vmem:[#allocation2 + $0x160] sm:$0xff]
    %v341 = vld [vmem:[#allocation2 + $0x168] sm:$0xff]
    %v342 = vld [vmem:[#allocation2 + $0x170] sm:$0xff]
    %v343 = vld [vmem:[#allocation2 + $0x178] sm:$0xff]
    %v344 = vld [vmem:[#allocation2 + $0x180] sm:$0xff]
    %v345 = vld [vmem:[#allocation2 + $0x188] sm:$0xff]
    %v346 = vld [vmem:[#allocation2 + $0x190] sm:$0xff]
    %v347 = vld [vmem:[#allocation2 + $0x198] sm:$0xff]
    %v348 = vld [vmem:[#allocation2 + $0x1a0] sm:$0xff]
    %v349 = vld [vmem:[#allocation2 + $0x1a8] sm:$0xff]
    %v350 = vld [vmem:[#allocation2 + $0x1b0] sm:$0xff]
    %v351 = vld [vmem:[#allocation2 + $0x1b8] sm:$0xff]
    %v352 = vld [vmem:[#allocation2 + $0x1c0] sm:$0xff]
    %v353 = vld [vmem:[#allocation2 + $0x1c8] sm:$0xff]
    %v354 = vld [vmem:[#allocation2 + $0x1d0] sm:$0xff]
    %v355 = vld [vmem:[#allocation2 + $0x1d8] sm:$0xff]
    %v356 = vld [vmem:[#allocation2 + $0x1e0] sm:$0xff]
    %v357 = vld [vmem:[#allocation2 + $0x1e8] sm:$0xff]
    %v358 = vld [vmem:[#allocation2 + $0x1f0] sm:$0xff]
    %v359 = vld [vmem:[#allocation2 + $0x1f8] sm:$0xff]
    %v360 = vld [vmem:[#allocation2 + $0x200] sm:$0xff]
    %v361 = vld [vmem:[#allocation2 + $0x208] sm:$0xff]
    %v362 = vld [vmem:[#allocation2 + $0x210] sm:$0xff]
    %v363 = vld [vmem:[#allocation2 + $0x218] sm:$0xff]
    %v364 = vld [vmem:[#allocation2 + $0x220] sm:$0xff]
    %v365 = vld [vmem:[#allocation2 + $0x228] sm:$0xff]
    %v366 = vld [vmem:[#allocation2 + $0x230] sm:$0xff]
    %v367 = vld [vmem:[#allocation2 + $0x238] sm:$0xff]
    %v368 = vld [vmem:[#allocation2 + $0x240] sm:$0xff]
    %v369 = vld [vmem:[#allocation2 + $0x248] sm:$0xff]
    %v370 = vld [vmem:[#allocation2 + $0x250] sm:$0xff]
    %v371 = vld [vmem:[#allocation2 + $0x258] sm:$0xff]
    %v372 = vld [vmem:[#allocation2 + $0x260] sm:$0xff]
    %v373 = vld [vmem:[#allocation2 + $0x268] sm:$0xff]
    %v374 = vld [vmem:[#allocation2 + $0x270] sm:$0xff]
    %v375 = vld [vmem:[#allocation2 + $0x278] sm:$0xff]
    %v376 = vld [vmem:[#allocation2 + $0x280] sm:$0xff]
    %v377 = vld [vmem:[#allocation2 + $0x288] sm:$0xff]
    %v378 = vld [vmem:[#allocation2 + $0x290] sm:$0xff]
    %v379 = vld [vmem:[#allocation2 + $0x298] sm:$0xff]
    %v380 = vld [vmem:[#allocation2 + $0x2a0] sm:$0xff]
    %v381 = vld [vmem:[#allocation2 + $0x2a8] sm:$0xff]
    %v382 = vld [vmem:[#allocation2 + $0x2b0] sm:$0xff]
    %v383 = vld [vmem:[#allocation2 + $0x2b8] sm:$0xff]
    %v384 = vld [vmem:[#allocation2 + $0x2c0] sm:$0xff]
    %v385 = vld [vmem:[#allocation2 + $0x2c8] sm:$0xff]
    %v386 = vld [vmem:[#allocation2 + $0x2d0] sm:$0xff]
    %v387 = vld [vmem:[#allocation2 + $0x2d8] sm:$0xff]
    %v388 = vld [vmem:[#allocation2 + $0x2e0] sm:$0xff]
    %v389 = vld [vmem:[#allocation2 + $0x2e8] sm:$0xff]
    %v390 = vld [vmem:[#allocation2 + $0x2f0] sm:$0xff]
    %v391 = vld [vmem:[#allocation2 + $0x2f8] sm:$0xff]
    %v392 = vld [vmem:[#allocation2 + $0x300] sm:$0xff]
    %v393 = vld [vmem:[#allocation2 + $0x308] sm:$0xff]
    %v394 = vld [vmem:[#allocation2 + $0x310] sm:$0xff]
    %v395 = vld [vmem:[#allocation2 + $0x318] sm:$0xff]
    %v396 = vld [vmem:[#allocation2 + $0x320] sm:$0xff]
    %v397 = vld [vmem:[#allocation2 + $0x328] sm:$0xff]
    %v398 = vld [vmem:[#allocation2 + $0x330] sm:$0xff]
    %v399 = vld [vmem:[#allocation2 + $0x338] sm:$0xff]
    %v400 = vld [vmem:[#allocation2 + $0x340] sm:$0xff]
    %v401 = vld [vmem:[#allocation2 + $0x348] sm:$0xff]
    %v402 = vld [vmem:[#allocation2 + $0x350] sm:$0xff]
    %v403 = vld [vmem:[#allocation2 + $0x358] sm:$0xff]
    %v404 = vld [vmem:[#allocation2 + $0x360] sm:$0xff]
    %v405 = vld [vmem:[#allocation2 + $0x368] sm:$0xff]
    %v406 = vld [vmem:[#allocation2 + $0x370] sm:$0xff]
    %v407 = vld [vmem:[#allocation2 + $0x378] sm:$0xff]
    %v408 = vld [vmem:[#allocation2 + $0x380] sm:$0xff]
    %v409 = vld [vmem:[#allocation2 + $0x388] sm:$0xff]
    %v410 = vld [vmem:[#allocation2 + $0x390] sm:$0xff]
    %v411 = vld [vmem:[#allocation2 + $0x398] sm:$0xff]
    %v412 = vld [vmem:[#allocation2 + $0x3a0] sm:$0xff]
    %v413 = vld [vmem:[#allocation2 + $0x3a8] sm:$0xff]
    %v414 = vld [vmem:[#allocation2 + $0x3b0] sm:$0xff]
    %v415 = vld [vmem:[#allocation2 + $0x3b8] sm:$0xff]
    %v416 = vld [vmem:[#allocation2 + $0x3c0] sm:$0xff]
    %v417 = vld [vmem:[#allocation2 + $0x3c8] sm:$0xff]
    %v418 = vld [vmem:[#allocation2 + $0x3d0] sm:$0xff]
    %v419 = vld [vmem:[#allocation2 + $0x3d8] sm:$0xff]
    %v420 = vld [vmem:[#allocation2 + $0x3e0] sm:$0xff]
    %v421 = vld [vmem:[#allocation2 + $0x3e8] sm:$0xff]
    %v422 = vld [vmem:[#allocation2 + $0x3f0] sm:$0xff]
    %v423 = vld [vmem:[#allocation2 + $0x3f8] sm:$0xff]
    %v424 = vld [vmem:[%s4] sm:$0xf]
    %v426 = vperm.slane %v424, 0
    %v427 = vperm.slane %v424, 1
    %v428 = vperm.slane %v424, 2
    %v429 = vperm.slane %v424, 3
    %434 = vmatpush.msra.mxu0 %v356
    %435 = vmatpush.msra.mxu0 %v352
    %436 = vmatpush.msra.mxu0 %v348
    %437 = vmatpush.msra.mxu0 %v344
    %438 = vmatpush.msra.mxu0 %v340
    %439 = vmatpush.msra.mxu0 %v336
    %440 = vmatpush.msra.mxu0 %v332
    %441 = vmatpush.msra.mxu0 %v328
    %442 = vmatpush.msra.mxu0 %v324
    %443 = vmatpush.msra.mxu0 %v320
    %444 = vmatpush.msra.mxu0 %v316
    %445 = vmatpush.msra.mxu0 %v312
    %446 = vmatpush.msra.mxu0 %v308
    %447 = vmatpush.msra.mxu0 %v304
    %448 = vmatpush.msra.mxu0 %v300
    %449 = vmatpush.msra.mxu0 %v296
    %450 = vmatmul.f32.gmra.mxu0 %v274
    %v451 = vpop.f32.mrf.mxu0
    %v452 = vadd.f32 %v426, %v451
    %453 = vdwg.mxu0
    %454 = vmatpush.msra.mxu0 %v420
    %455 = vmatpush.msra.mxu0 %v416
    %456 = vmatpush.msra.mxu0 %v412
    %457 = vmatpush.msra.mxu0 %v408
    %458 = vmatpush.msra.mxu0 %v404
    %459 = vmatpush.msra.mxu0 %v400
    %460 = vmatpush.msra.mxu0 %v396
    %461 = vmatpush.msra.mxu0 %v392
    %462 = vmatpush.msra.mxu0 %v388
    %463 = vmatpush.msra.mxu0 %v384
    %464 = vmatpush.msra.mxu0 %v380
    %465 = vmatpush.msra.mxu0 %v376
    %466 = vmatpush.msra.mxu0 %v372
    %467 = vmatpush.msra.mxu0 %v368
    %468 = vmatpush.msra.mxu0 %v364
    %469 = vmatpush.msra.mxu0 %v360
    %470 = vmatmul.f32.gmra.mxu0 %v294
    %v471 = vpop.f32.mrf.mxu0
    %v472 = vadd.f32 %v452, %v471
    %473 = vdwg.mxu0
    %474 = vmatpush.msra.mxu0 %v357
    %475 = vmatpush.msra.mxu0 %v353
    %476 = vmatpush.msra.mxu0 %v349
    %477 = vmatpush.msra.mxu0 %v345
    %478 = vmatpush.msra.mxu0 %v341
    %479 = vmatpush.msra.mxu0 %v337
    %480 = vmatpush.msra.mxu0 %v333
    %481 = vmatpush.msra.mxu0 %v329
    %482 = vmatpush.msra.mxu0 %v325
    %483 = vmatpush.msra.mxu0 %v321
    %484 = vmatpush.msra.mxu0 %v317
    %485 = vmatpush.msra.mxu0 %v313
    %486 = vmatpush.msra.mxu0 %v309
    %487 = vmatpush.msra.mxu0 %v305
    %488 = vmatpush.msra.mxu0 %v301
    %489 = vmatpush.msra.mxu0 %v297
    %490 = vmatmul.f32.gmra.mxu0 %v274
    %v491 = vpop.f32.mrf.mxu0
    %v492 = vadd.f32 %v427, %v491
    %493 = vdwg.mxu0
    %494 = vmatpush.msra.mxu0 %v421
    %495 = vmatpush.msra.mxu0 %v417
    %496 = vmatpush.msra.mxu0 %v413
    %497 = vmatpush.msra.mxu0 %v409
    %498 = vmatpush.msra.mxu0 %v405
    %499 = vmatpush.msra.mxu0 %v401
    %500 = vmatpush.msra.mxu0 %v397
    %501 = vmatpush.msra.mxu0 %v393
    %502 = vmatpush.msra.mxu0 %v389
    %503 = vmatpush.msra.mxu0 %v385
    %504 = vmatpush.msra.mxu0 %v381
    %505 = vmatpush.msra.mxu0 %v377
    %506 = vmatpush.msra.mxu0 %v373
    %507 = vmatpush.msra.mxu0 %v369
    %508 = vmatpush.msra.mxu0 %v365
    %509 = vmatpush.msra.mxu0 %v361
    %510 = vmatmul.f32.gmra.mxu0 %v294
    %v511 = vpop.f32.mrf.mxu0
    %v512 = vadd.f32 %v492, %v511
    %513 = vdwg.mxu0
    %514 = vmatpush.msra.mxu0 %v358
    %515 = vmatpush.msra.mxu0 %v354
    %516 = vmatpush.msra.mxu0 %v350
    %517 = vmatpush.msra.mxu0 %v346
    %518 = vmatpush.msra.mxu0 %v342
    %519 = vmatpush.msra.mxu0 %v338
    %520 = vmatpush.msra.mxu0 %v334
    %521 = vmatpush.msra.mxu0 %v330
    %522 = vmatpush.msra.mxu0 %v326
    %523 = vmatpush.msra.mxu0 %v322
    %524 = vmatpush.msra.mxu0 %v318
    %525 = vmatpush.msra.mxu0 %v314
    %526 = vmatpush.msra.mxu0 %v310
    %527 = vmatpush.msra.mxu0 %v306
    %528 = vmatpush.msra.mxu0 %v302
    %529 = vmatpush.msra.mxu0 %v298
    %530 = vmatmul.f32.gmra.mxu0 %v274
    %v531 = vpop.f32.mrf.mxu0
    %v532 = vadd.f32 %v428, %v531
    %533 = vdwg.mxu0
    %534 = vmatpush.msra.mxu0 %v422
    %535 = vmatpush.msra.mxu0 %v418
    %536 = vmatpush.msra.mxu0 %v414
    %537 = vmatpush.msra.mxu0 %v410
    %538 = vmatpush.msra.mxu0 %v406
    %539 = vmatpush.msra.mxu0 %v402
    %540 = vmatpush.msra.mxu0 %v398
    %541 = vmatpush.msra.mxu0 %v394
    %542 = vmatpush.msra.mxu0 %v390
    %543 = vmatpush.msra.mxu0 %v386
    %544 = vmatpush.msra.mxu0 %v382
    %545 = vmatpush.msra.mxu0 %v378
    %546 = vmatpush.msra.mxu0 %v374
    %547 = vmatpush.msra.mxu0 %v370
    %548 = vmatpush.msra.mxu0 %v366
    %549 = vmatpush.msra.mxu0 %v362
    %550 = vmatmul.f32.gmra.mxu0 %v294
    %v551 = vpop.f32.mrf.mxu0
    %v552 = vadd.f32 %v532, %v551
    %553 = vdwg.mxu0
    %554 = vmatpush.msra.mxu0 %v359
    %555 = vmatpush.msra.mxu0 %v355
    %556 = vmatpush.msra.mxu0 %v351
    %557 = vmatpush.msra.mxu0 %v347
    %558 = vmatpush.msra.mxu0 %v343
    %559 = vmatpush.msra.mxu0 %v339
    %560 = vmatpush.msra.mxu0 %v335
    %561 = vmatpush.msra.mxu0 %v331
    %562 = vmatpush.msra.mxu0 %v327
    %563 = vmatpush.msra.mxu0 %v323
    %564 = vmatpush.msra.mxu0 %v319
    %565 = vmatpush.msra.mxu0 %v315
    %566 = vmatpush.msra.mxu0 %v311
    %567 = vmatpush.msra.mxu0 %v307
    %568 = vmatpush.msra.mxu0 %v303
    %569 = vmatpush.msra.mxu0 %v299
    %570 = vmatmul.f32.gmra.mxu0 %v274
    %v571 = vpop.f32.mrf.mxu0
    %v572 = vadd.f32 %v429, %v571
    %573 = vdwg.mxu0
    %574 = vmatpush.msra.mxu0 %v423
    %575 = vmatpush.msra.mxu0 %v419
    %576 = vmatpush.msra.mxu0 %v415
    %577 = vmatpush.msra.mxu0 %v411
    %578 = vmatpush.msra.mxu0 %v407
    %579 = vmatpush.msra.mxu0 %v403
    %580 = vmatpush.msra.mxu0 %v399
    %581 = vmatpush.msra.mxu0 %v395
    %582 = vmatpush.msra.mxu0 %v391
    %583 = vmatpush.msra.mxu0 %v387
    %584 = vmatpush.msra.mxu0 %v383
    %585 = vmatpush.msra.mxu0 %v379
    %586 = vmatpush.msra.mxu0 %v375
    %587 = vmatpush.msra.mxu0 %v371
    %588 = vmatpush.msra.mxu0 %v367
    %589 = vmatpush.msra.mxu0 %v363
    %590 = vmatmul.f32.gmra.mxu0 %v294
    %v591 = vpop.f32.mrf.mxu0
    %v592 = vadd.f32 %v572, %v591
    %593 = vdwg.mxu0
    %v598 = vrot.slane %v512, 7
    %v599 = vrot.slane %v552, 6
    %v600 = vrot.slane %v592, 5
    %vm601 = vcmask 1040384
    %v602 = vsel %vm601, %v472, %v598
    %vm603 = vcmask 1042434
    %v604 = vsel %vm603, %v599, %v600
    %vm605 = vcmask 1041408
    %v606 = vsel %vm605, %v602, %v604
    %v607 = vsel %vm252, %v472, %v598
    %vm608 = vcmask 1043459
    %v609 = vsel %vm608, %v599, %v600
    %vm610 = vcmask 1042433
    %v611 = vsel %vm610, %v607, %v609
    %v612 = vrot.slane %v611, 1
    %v615 = vlaneseq
    %vm616 = vcmp.ge.s32.totalorder %v615, 0
    %vm617 = vcmp.lt.s32.totalorder %v615, 512
    %vm618 = vmand %vm616, %vm617
    %619 = vst.msk [vmem:[#allocation5] sm:$0xf] %vm618, %v606
    %620 = vst.msk [vmem:[#allocation5 + $0x4] sm:$0xf] %vm618, %v612
    // Predicated region
    $region26: #{tpu_custom_call.1} parent=1 // pred_check
      _
    $region27: #{tpu_custom_call.1} parent=1 // pred_check_branch
      %622 = sbr.rel (0) target = $region29
    $region28: #{tpu_custom_call.1} parent=1 // pred_region
      %624 = vsyncadd [#allocation4], 0
      %s625 = sshll.u32 [#allocation5], 4
      %s626 = int_to_ptr.vmem [resolvable:$true] %s625
      %s627 = sshll.u32 %s5, 4
      %s628 = int_to_ptr.hbm [resolvable:$true] %s627
      %633 = dma.vmem_to_hbm [thread:$0]  %s626, 128, %s628, [#allocation4], 64, 64, 4
    $region29: #{tpu_custom_call.1} parent=1 // pred_fallthru
      _
    // Predicated region
    $region30: #{tpu_custom_call.1} parent=1 // pred_check
      _
    $region31: #{tpu_custom_call.1} parent=1 // pred_check_branch
      %635 = sbr.rel (0) target = $region33
    $region32: #{tpu_custom_call.1} parent=1 // pred_region
      %637 = dma.done [#allocation4], 128
    $region33: #{tpu_custom_call.1} parent=1 // pred_fallthru
      _
    %638 = vsyncpa [#allocation3], 1
    %639 = vsyncpa [#allocation4], 1

</llo_original>
